<compile_context>
chip_gen: v7x
topology: tpu7x:2x2x1
jax: 0.10.0
libtpu: 0.0.40
codegen_flags: <defaults>
</compile_context>

<pallas_src>
import functools

import jax
import jax.numpy as jnp
from jax import lax
from jax.experimental import pallas as pl
from jax.experimental.pallas import tpu as pltpu


def _round_up(x, m):
    return (x + m - 1) // m * m


def _choose_tile(b128, block_b):
    """Pick a batch tile that is a multiple of 128 AND divides b128 (so no
    tb-multiple padding is ever needed), capped at block_b, with >= 2 grid
    steps whenever b128 >= 256 (v7x megacore sharding of the batch axis)."""
    block_b = max(128, _round_up(int(block_b), 128))
    units = b128 // 128                         # b128 is a multiple of 128
    max_units = max(1, min(block_b // 128, units))
    if units >= 2:
        max_units = min(max_units, max(1, units // 2))
    t_units = max(d for d in range(1, max_units + 1) if units % d == 0)
    return t_units * 128


def _mlp_kernel(img_ref, cap_ref, w1i_ref, w1c_ref, b1_ref, w2_ref, b2_ref, o_ref):
    # img_ref : [TB, D_img]   cap_ref : [TB, D_cap]
    # w1i_ref : [D_img, Hp]   w1c_ref : [D_cap, Hp]   b1_ref : [1, Hp]
    # w2_ref  : [1, Hp]       b2_ref  : [1]  (SMEM scalar)
    # o_ref   : [1, TB]       lane-dense row of per-sample outputs
    h = jnp.dot(img_ref[...], w1i_ref[...], preferred_element_type=jnp.float32)
    h = h + jnp.dot(cap_ref[...], w1c_ref[...], preferred_element_type=jnp.float32)
    h = jnp.maximum(h + b1_ref[...], 0.0)                    # ReLU, [TB, Hp]
    # fc2 (single output feature): contract the 128-lane hidden dim with one
    # MXU pass, emitting the batch directly on the lane axis -> no XLU
    # cross-lane reduce and no [TB] -> [1, TB] relayout.
    y = lax.dot_general(w2_ref[...], h, (((1,), (1,)), ((), ())),
                        preferred_element_type=jnp.float32)  # [1, TB]
    o_ref[...] = (y + b2_ref[0]).astype(o_ref.dtype)


def prepare_params(params, d_img, *, lane=128):
    """One-time relayout of PyTorch-style Linear params for the kernel.
    Splits W1 by input source (avoids the cat), transposes to [D, H], and
    zero-pads the hidden dim to a multiple of 128 lanes."""
    w1 = jnp.asarray(params["w1"], jnp.float32)          # [H, D]
    b1 = jnp.asarray(params["b1"], jnp.float32)          # [H]
    w2 = jnp.asarray(params["w2"], jnp.float32).reshape(-1)  # [H]
    b2 = jnp.asarray(params["b2"], jnp.float32).reshape(1)
    H = w1.shape[0]
    h_pad = _round_up(H, lane)
    w1_t = w1.T                                           # [D, H]
    if h_pad != H:
        pad = h_pad - H
        w1_t = jnp.pad(w1_t, ((0, 0), (0, pad)))
        b1 = jnp.pad(b1, (0, pad))
        w2 = jnp.pad(w2, (0, pad))
    return {
        "w1_img": w1_t[:d_img],                           # [D_img, Hp]
        "w1_cap": w1_t[d_img:],                           # [D_cap, Hp]
        "b1": b1.reshape(1, h_pad),
        "w2": w2.reshape(1, h_pad),
        "b2": b2,
    }


def mlpnn_forward(img_features, cap_features, prep, *, block_b=4096):
    """Pallas implementation of MLPNN.forward.

    img_features: [B, D_img] (f32 or bf16)
    cap_features: [B, D_cap] (f32 or bf16)
    prep: output of prepare_params()
    returns: [B] f32
    """
    B, d_img = img_features.shape
    d_cap = cap_features.shape[1]
    h_pad = prep["b1"].shape[1]

    # Pad only to the 128-sublane boundary (small remainder); tb always divides
    # b128, so there is never a pad-to-tile-multiple full-array copy.
    b128 = _round_up(B, 128)
    if b128 != B:
        rem = b128 - B
        img_features = jnp.pad(img_features, ((0, rem), (0, 0)))
        cap_features = jnp.pad(cap_features, ((0, rem), (0, 0)))

    tb = _choose_tile(b128, block_b)
    grid = (b128 // tb,)

    out = pl.pallas_call(
        _mlp_kernel,
        out_shape=jax.ShapeDtypeStruct((1, b128), jnp.float32),
        grid=grid,
        in_specs=[
            pl.BlockSpec((tb, d_img), lambda i: (i, 0)),
            pl.BlockSpec((tb, d_cap), lambda i: (i, 0)),
            # Weights / biases: same block every step -> stay VMEM-resident.
            pl.BlockSpec((d_img, h_pad), lambda i: (0, 0)),
            pl.BlockSpec((d_cap, h_pad), lambda i: (0, 0)),
            pl.BlockSpec((1, h_pad), lambda i: (0, 0)),
            pl.BlockSpec((1, h_pad), lambda i: (0, 0)),
            pl.BlockSpec(memory_space=pltpu.MemorySpace.SMEM),   # b2 scalar
        ],
        out_specs=pl.BlockSpec((1, tb), lambda i: (0, i)),
        compiler_params=pltpu.CompilerParams(
            dimension_semantics=("parallel",)),
    )(
        img_features,          # streamed in caller dtype (bf16 supported)
        cap_features,
        prep["w1_img"], prep["w1_cap"], prep["b1"], prep["w2"], prep["b2"],
    )
    # Drop padded rows and flatten, matching x.view(x.size(0)).
    return out.reshape(b128)[:B]


def init_params(key, input_size):
    """Deterministic init matching nn.Linear shapes (uniform +/- 1/sqrt(fan_in))."""
    hidden = input_size // 2
    k1, k2, k3, k4 = jax.random.split(key, 4)
    lim1 = 1.0 / jnp.sqrt(jnp.float32(input_size))
    lim2 = 1.0 / jnp.sqrt(jnp.float32(hidden))
    return {
        "w1": jax.random.uniform(k1, (hidden, input_size), jnp.float32, -lim1, lim1),
        "b1": jax.random.uniform(k2, (hidden,), jnp.float32, -lim1, lim1),
        "w2": jax.random.uniform(k3, (1, hidden), jnp.float32, -lim2, lim2),
        "b2": jax.random.uniform(k4, (1,), jnp.float32, -lim2, lim2),
    }


if __name__ == "__main__":
    key = jax.random.PRNGKey(0)
    k_img, k_cap, k_par, k_img2, k_cap2 = jax.random.split(key, 5)

    D_img, D_cap = 32, 32
    input_size = D_img + D_cap           # 64 -> hidden 32 -> out 1
    params = init_params(k_par, input_size)
    prep = prepare_params(params, D_img)     # one-time relayout, not per call

    def reference(img, cap):
        x = jnp.concatenate((img, cap), axis=1).astype(jnp.float32)
        h = jnp.maximum(x @ params["w1"].T + params["b1"], 0.0)
        return (h @ params["w2"].T + params["b2"]).reshape(x.shape[0])

    fwd = jax.jit(functools.partial(mlpnn_forward, block_b=4096))

    # Small-batch check (single 128-row tile).
    B1 = 8
    img1 = jax.random.normal(k_img, (B1, D_img), jnp.float32)
    cap1 = jax.random.normal(k_cap, (B1, D_cap), jnp.float32)
    out1 = jax.block_until_ready(fwd(img1, cap1, prep))
    assert out1.shape == (B1,)
    assert jnp.allclose(out1, reference(img1, cap1), atol=1e-4, rtol=1e-4)

    # Non-128-aligned batch (multi-step grid + small remainder padding).
    B2 = 300
    img2 = jax.random.normal(k_img2, (B2, D_img), jnp.float32)
    cap2 = jax.random.normal(k_cap2, (B2, D_cap), jnp.float32)
    out2 = jax.block_until_ready(fwd(img2, cap2, prep))
    assert out2.shape == (B2,)
    assert jnp.allclose(out2, reference(img2, cap2), atol=1e-4, rtol=1e-4)

    print("KERNEL_OK")
</pallas_src>

<mosaic_0001>
module attributes {stable_mosaic.version = 11 : i64} {
  func.func @_mlp_kernel(%arg0: i32, %arg1: memref<128x32xf32, #tpu.memory_space<vmem>>, %arg2: memref<128x32xf32, #tpu.memory_space<vmem>>, %arg3: memref<32x128xf32, #tpu.memory_space<vmem>>, %arg4: memref<32x128xf32, #tpu.memory_space<vmem>>, %arg5: memref<1x128xf32, #tpu.memory_space<vmem>>, %arg6: memref<1x128xf32, #tpu.memory_space<vmem>>, %arg7: memref<1xf32, #tpu.memory_space<smem>>, %arg8: memref<1x128xf32, #tpu.memory_space<vmem>>) attributes {dimension_semantics = [#tpu.dimension_semantics<parallel>], iteration_bounds = array<i64: 1>, scalar_prefetch = 0 : i64, scratch_operands = 0 : i64, tpu.core_type = #tpu.core_type<tc>, window_params = [{transform_indices = @transform_0, window_bounds = array<i64: 128, 32>}, {transform_indices = @transform_1, window_bounds = array<i64: 128, 32>}, {pipeline_mode = #tpu.pipeline_mode<synchronous>, transform_indices = @transform_2, window_bounds = array<i64: 32, 128>}, {pipeline_mode = #tpu.pipeline_mode<synchronous>, transform_indices = @transform_3, window_bounds = array<i64: 32, 128>}, {pipeline_mode = #tpu.pipeline_mode<synchronous>, transform_indices = @transform_4, window_bounds = array<i64: 1, 128>}, {pipeline_mode = #tpu.pipeline_mode<synchronous>, transform_indices = @transform_5, window_bounds = array<i64: 1, 128>}, {transform_indices = @transform_6, window_bounds = array<i64: 1>}, {transform_indices = @transform_7, window_bounds = array<i64: 1, 128>}]} {
    %c0 = arith.constant 0 : index
    %c0_0 = arith.constant 0 : index
    %0 = vector.load %arg1[%c0, %c0_0] : memref<128x32xf32, #tpu.memory_space<vmem>>, vector<128x32xf32>
    %c0_1 = arith.constant 0 : index
    %c0_2 = arith.constant 0 : index
    %1 = vector.load %arg3[%c0_1, %c0_2] : memref<32x128xf32, #tpu.memory_space<vmem>>, vector<32x128xf32>
    %cst = arith.constant dense<0.000000e+00> : vector<128x128xf32>
    %2 = tpu.matmul %0, %1, %cst {dimension_numbers = #tpu.dot_dimension_numbers<[1], [0], [0], [1], [0, 0, 1, 1], [], []>} : vector<128x32xf32>, vector<32x128xf32>, vector<128x128xf32> -> vector<128x128xf32>
    %c0_3 = arith.constant 0 : index
    %c0_4 = arith.constant 0 : index
    %3 = vector.load %arg2[%c0_3, %c0_4] : memref<128x32xf32, #tpu.memory_space<vmem>>, vector<128x32xf32>
    %c0_5 = arith.constant 0 : index
    %c0_6 = arith.constant 0 : index
    %4 = vector.load %arg4[%c0_5, %c0_6] : memref<32x128xf32, #tpu.memory_space<vmem>>, vector<32x128xf32>
    %cst_7 = arith.constant dense<0.000000e+00> : vector<128x128xf32>
    %5 = tpu.matmul %3, %4, %cst_7 {dimension_numbers = #tpu.dot_dimension_numbers<[1], [0], [0], [1], [0, 0, 1, 1], [], []>} : vector<128x32xf32>, vector<32x128xf32>, vector<128x128xf32> -> vector<128x128xf32>
    %6 = arith.addf %2, %5 : vector<128x128xf32>
    %c0_8 = arith.constant 0 : index
    %c0_9 = arith.constant 0 : index
    %7 = vector.load %arg5[%c0_8, %c0_9] : memref<1x128xf32, #tpu.memory_space<vmem>>, vector<1x128xf32>
    %8 = vector.broadcast %7 : vector<1x128xf32> to vector<128x128xf32>
    %9 = arith.addf %6, %8 : vector<128x128xf32>
    %cst_10 = arith.constant 0.000000e+00 : f32
    %10 = vector.broadcast %cst_10 : f32 to vector<128x128xf32>
    %11 = arith.maximumf %9, %10 : vector<128x128xf32>
    %c0_11 = arith.constant 0 : index
    %c0_12 = arith.constant 0 : index
    %12 = vector.load %arg6[%c0_11, %c0_12] : memref<1x128xf32, #tpu.memory_space<vmem>>, vector<1x128xf32>
    %cst_13 = arith.constant dense<0.000000e+00> : vector<1x128xf32>
    %13 = tpu.matmul %12, %11, %cst_13 {dimension_numbers = #tpu.dot_dimension_numbers<[1], [1], [0], [0], [0, 0, 1, 0], [], []>} : vector<1x128xf32>, vector<128x128xf32>, vector<1x128xf32> -> vector<1x128xf32>
    %c0_14 = arith.constant 0 : index
    %14 = memref.load %arg7[%c0_14] : memref<1xf32, #tpu.memory_space<smem>>
    %15 = vector.broadcast %14 : f32 to vector<1x128xf32>
    %16 = arith.addf %13, %15 : vector<1x128xf32>
    %c0_15 = arith.constant 0 : index
    %c0_16 = arith.constant 0 : index
    %17 = vector.load %arg8[%c0_15, %c0_16] : memref<1x128xf32, #tpu.memory_space<vmem>>, vector<1x128xf32>
    tpu.vector_store %arg8[%c0_15, %c0_16], %16 {strides = array<i32>} : memref<1x128xf32, #tpu.memory_space<vmem>>, vector<1x128xf32>,
    return
  }
  func.func @transform_0(%arg0: i32) -> (i32, i32) {
    %c0_i32 = arith.constant 0 : i32
    %c0_i32_0 = arith.constant 0 : i32
    return %arg0, %c0_i32 : i32, i32
  }
  func.func @transform_1(%arg0: i32) -> (i32, i32) {
    %c0_i32 = arith.constant 0 : i32
    %c0_i32_0 = arith.constant 0 : i32
    return %arg0, %c0_i32 : i32, i32
  }
  func.func @transform_2(%arg0: i32) -> (i32, i32) {
    %c0_i32 = arith.constant 0 : i32
    %c0_i32_0 = arith.constant 0 : i32
    %c0_i32_1 = arith.constant 0 : i32
    return %c0_i32, %c0_i32_0 : i32, i32
  }
  func.func @transform_3(%arg0: i32) -> (i32, i32) {
    %c0_i32 = arith.constant 0 : i32
    %c0_i32_0 = arith.constant 0 : i32
    %c0_i32_1 = arith.constant 0 : i32
    return %c0_i32, %c0_i32_0 : i32, i32
  }
  func.func @transform_4(%arg0: i32) -> (i32, i32) {
    %c0_i32 = arith.constant 0 : i32
    %c0_i32_0 = arith.constant 0 : i32
    %c0_i32_1 = arith.constant 0 : i32
    return %c0_i32, %c0_i32_0 : i32, i32
  }
  func.func @transform_5(%arg0: i32) -> (i32, i32) {
    %c0_i32 = arith.constant 0 : i32
    %c0_i32_0 = arith.constant 0 : i32
    %c0_i32_1 = arith.constant 0 : i32
    return %c0_i32, %c0_i32_0 : i32, i32
  }
  func.func @transform_6(%arg0: i32) -> i32 {
    %c0_i32 = arith.constant 0 : i32
    %c0_i32_0 = arith.constant 0 : i32
    return %c0_i32 : i32
  }
  func.func @transform_7(%arg0: i32) -> (i32, i32) {
    %c0_i32 = arith.constant 0 : i32
    %c0_i32_0 = arith.constant 0 : i32
    return %c0_i32, %arg0 : i32, i32
  }
}

</mosaic_0001>

<llo_original>
// kernel: mlpnn_forward.1
$region0: #{mlpnn_forward.1}
  #allocation0 [shape = 'u32[]', space=smem, size = 0x4, offset = 0x4, fixed_abs, tag = 'smem constant byte address 0x4 - core index']
  #allocation1 [shape = 'u32[144,128]{1,0:T(1,128)}', space=vmem, size = 0x12000, scoped, tag = 'internal scratch']
  #allocation2 [shape = 'f32[1]{0:T(128)S(6)}', space=smem, size = 0x200, scoped, tag = 'scoped memory for mlpnn_forward.1']
  %s0 = inlined_call_operand.vmem [shape: f32[128,32], index: 0, kind: input, shape index: {}]
  %s1 = inlined_call_operand.vmem [shape: f32[128,32], index: 1, kind: input, shape index: {}]
  %s2 = inlined_call_operand.vmem [shape: f32[32,128], index: 2, kind: input, shape index: {}]
  %s3 = inlined_call_operand.vmem [shape: f32[32,128], index: 3, kind: input, shape index: {}]
  %s4 = inlined_call_operand.vmem [shape: f32[1,128], index: 4, kind: input, shape index: {}]
  %s5 = inlined_call_operand.vmem [shape: f32[1,128], index: 5, kind: input, shape index: {}]
  %s6 = inlined_call_operand.<no memory space> [shape: f32[1], index: 6, kind: input, shape index: {}]
  %s7 = inlined_call_operand.vmem [shape: f32[1,128], index: 7, kind: output, shape index: {}]
  %s8 = sld [smem:[#allocation0]]
  $region38: #{mlpnn_forward.1} parent=0
    _
  %s10 = ssub.s32 1, %s8
  %s11 = scalar_select 0, %s10, %s8
  %12 = sst [smem:[#allocation2]] %s6
  // Predicated region
  $region2: #{mlpnn_forward.1} parent=0 // pred_check
    _
  $region3: #{mlpnn_forward.1} parent=0 // pred_check_branch
    %14 = sbr.rel (0) target = $region5
  $region4: #{mlpnn_forward.1} parent=0 // pred_region
    _
  $region5: #{mlpnn_forward.1} parent=0 // pred_fallthru
    _
  // Predicated region
  $region6: #{mlpnn_forward.1} parent=0 // pred_check
    _
  $region7: #{mlpnn_forward.1} parent=0 // pred_check_branch
    %16 = sbr.rel (0) target = $region9
  $region8: #{mlpnn_forward.1} parent=0 // pred_region
    _
  $region9: #{mlpnn_forward.1} parent=0 // pred_fallthru
    _
  // Predicated region
  $region10: #{mlpnn_forward.1} parent=0 // pred_check
    _
  $region11: #{mlpnn_forward.1} parent=0 // pred_check_branch
    %18 = sbr.rel (0) target = $region13
  $region12: #{mlpnn_forward.1} parent=0 // pred_region
    _
  $region13: #{mlpnn_forward.1} parent=0 // pred_fallthru
    _
  // Predicated region
  $region14: #{mlpnn_forward.1} parent=0 // pred_check
    _
  $region15: #{mlpnn_forward.1} parent=0 // pred_check_branch
    %20 = sbr.rel (0) target = $region17
  $region16: #{mlpnn_forward.1} parent=0 // pred_region
    _
  $region17: #{mlpnn_forward.1} parent=0 // pred_fallthru
    _
  // Predicated region
  $region18: #{mlpnn_forward.1} parent=0 // pred_check
    _
  $region19: #{mlpnn_forward.1} parent=0 // pred_check_branch
    %22 = sbr.rel (0) target = $region21
  $region20: #{mlpnn_forward.1} parent=0 // pred_region
    _
  $region21: #{mlpnn_forward.1} parent=0 // pred_fallthru
    _
  // Predicated region
  $region22: #{mlpnn_forward.1} parent=0 // pred_check
    _
  $region23: #{mlpnn_forward.1} parent=0 // pred_check_branch
    %24 = sbr.rel (0) target = $region25
  $region24: #{mlpnn_forward.1} parent=0 // pred_region
    _
  $region25: #{mlpnn_forward.1} parent=0 // pred_fallthru
    _
  // Predicated region
  $region26: #{mlpnn_forward.1} parent=0 // pred_check
    _
  $region27: #{mlpnn_forward.1} parent=0 // pred_check_branch
    %26 = sbr.rel (0) target = $region29
  $region28: #{mlpnn_forward.1} parent=0 // pred_region
    _
  $region29: #{mlpnn_forward.1} parent=0 // pred_fallthru
    _
  %v27 = vld [vmem:[%s0] sm:$0xff]
  %v28 = vld [vmem:[%s0 + $0x8] sm:$0xff]
  %v29 = vld [vmem:[%s0 + $0x10] sm:$0xff]
  %v30 = vld [vmem:[%s0 + $0x18] sm:$0xff]
  %v31 = vld [vmem:[%s0 + $0x20] sm:$0xff]
  %v32 = vld [vmem:[%s0 + $0x28] sm:$0xff]
  %v33 = vld [vmem:[%s0 + $0x30] sm:$0xff]
  %v34 = vld [vmem:[%s0 + $0x38] sm:$0xff]
  %v35 = vld [vmem:[%s0 + $0x40] sm:$0xff]
  %v36 = vld [vmem:[%s0 + $0x48] sm:$0xff]
  %v37 = vld [vmem:[%s0 + $0x50] sm:$0xff]
  %v38 = vld [vmem:[%s0 + $0x58] sm:$0xff]
  %v39 = vld [vmem:[%s0 + $0x60] sm:$0xff]
  %v40 = vld [vmem:[%s0 + $0x68] sm:$0xff]
  %v41 = vld [vmem:[%s0 + $0x70] sm:$0xff]
  %v42 = vld [vmem:[%s0 + $0x78] sm:$0xff]
  %v43 = vld [vmem:[%s2] sm:$0xff]
  %v44 = vld [vmem:[%s2 + $0x8] sm:$0xff]
  %v45 = vld [vmem:[%s2 + $0x10] sm:$0xff]
  %v46 = vld [vmem:[%s2 + $0x18] sm:$0xff]
  %v47 = vld [vmem:[%s1] sm:$0xff]
  %v48 = vld [vmem:[%s1 + $0x8] sm:$0xff]
  %v49 = vld [vmem:[%s1 + $0x10] sm:$0xff]
  %v50 = vld [vmem:[%s1 + $0x18] sm:$0xff]
  %v51 = vld [vmem:[%s1 + $0x20] sm:$0xff]
  %v52 = vld [vmem:[%s1 + $0x28] sm:$0xff]
  %v53 = vld [vmem:[%s1 + $0x30] sm:$0xff]
  %v54 = vld [vmem:[%s1 + $0x38] sm:$0xff]
  %v55 = vld [vmem:[%s1 + $0x40] sm:$0xff]
  %v56 = vld [vmem:[%s1 + $0x48] sm:$0xff]
  %v57 = vld [vmem:[%s1 + $0x50] sm:$0xff]
  %v58 = vld [vmem:[%s1 + $0x58] sm:$0xff]
  %v59 = vld [vmem:[%s1 + $0x60] sm:$0xff]
  %v60 = vld [vmem:[%s1 + $0x68] sm:$0xff]
  %v61 = vld [vmem:[%s1 + $0x70] sm:$0xff]
  %v62 = vld [vmem:[%s1 + $0x78] sm:$0xff]
  %v63 = vld [vmem:[%s3] sm:$0xff]
  %v64 = vld [vmem:[%s3 + $0x8] sm:$0xff]
  %v65 = vld [vmem:[%s3 + $0x10] sm:$0xff]
  %v66 = vld [vmem:[%s3 + $0x18] sm:$0xff]
  %vm67 = vcmask 261120
  %v69 = vsel %vm67, %v47, 0
  %v72 = vsel %vm67, %v48, 0
  %v75 = vsel %vm67, %v49, 0
  %v78 = vsel %vm67, %v50, 0
  %v81 = vsel %vm67, %v51, 0
  %v84 = vsel %vm67, %v52, 0
  %v87 = vsel %vm67, %v53, 0
  %v90 = vsel %vm67, %v54, 0
  %v93 = vsel %vm67, %v55, 0
  %v96 = vsel %vm67, %v56, 0
  %v99 = vsel %vm67, %v57, 0
  %v102 = vsel %vm67, %v58, 0
  %v105 = vsel %vm67, %v59, 0
  %v108 = vsel %vm67, %v60, 0
  %v111 = vsel %vm67, %v61, 0
  %v114 = vsel %vm67, %v62, 0
  %116 = vmatprep.subr.mxu0 0.0
  %117 = vmatpush1.msra.mxu0 %v63
  %118 = vmatprep.subr.mxu0 0.0
  %119 = vmatpush1.msra.mxu0 %v64
  %120 = vmatprep.subr.mxu0 0.0
  %121 = vmatpush1.msra.mxu0 %v65
  %122 = vmatprep.subr.mxu0 0.0
  %123 = vmatpush1.msra.mxu0 %v66
  %124 = vmatprep.subr.mxu0 0.0
  %125 = vmatpush1.msra.mxu0 0.0
  %126 = vmatprep.subr.mxu0 0.0
  %127 = vmatpush1.msra.mxu0 0.0
  %128 = vmatprep.subr.mxu0 0.0
  %129 = vmatpush1.msra.mxu0 0.0
  %130 = vmatprep.subr.mxu0 0.0
  %131 = vmatpush1.msra.mxu0 0.0
  %132 = vmatprep.subr.mxu0 0.0
  %133 = vmatpush1.msra.mxu0 0.0
  %134 = vmatprep.subr.mxu0 0.0
  %135 = vmatpush1.msra.mxu0 0.0
  %136 = vmatprep.subr.mxu0 0.0
  %137 = vmatpush1.msra.mxu0 0.0
  %138 = vmatprep.subr.mxu0 0.0
  %139 = vmatpush1.msra.mxu0 0.0
  %140 = vmatprep.subr.mxu0 0.0
  %141 = vmatpush1.msra.mxu0 0.0
  %142 = vmatprep.subr.mxu0 0.0
  %143 = vmatpush1.msra.mxu0 0.0
  %144 = vmatprep.subr.mxu0 0.0
  %145 = vmatpush1.msra.mxu0 0.0
  %146 = vmatprep.subr.mxu0 0.0
  %147 = vmatpush1.msra.mxu0 0.0
  %148 = vmatprep.subr.mxu0 0.0
  %149 = vmatpush1.msra.mxu0 0.0
  %150 = vmatprep.subr.mxu0 0.0
  %151 = vmatpush1.msra.mxu0 0.0
  %152 = vmatprep.subr.mxu0 0.0
  %153 = vmatpush1.msra.mxu0 0.0
  %154 = vmatprep.subr.mxu0 0.0
  %155 = vmatpush1.msra.mxu0 0.0
  %156 = vmatprep.subr.mxu0 0.0
  %157 = vmatpush1.msra.mxu0 0.0
  %158 = vmatprep.subr.mxu0 0.0
  %159 = vmatpush1.msra.mxu0 0.0
  %160 = vmatprep.subr.mxu0 0.0
  %161 = vmatpush1.msra.mxu0 0.0
  %162 = vmatprep.subr.mxu0 0.0
  %163 = vmatpush1.msra.mxu0 0.0
  %164 = vmatprep.subr.mxu0 0.0
  %165 = vmatpush1.msra.mxu0 0.0
  %166 = vmatprep.subr.mxu0 0.0
  %167 = vmatpush1.msra.mxu0 0.0
  %168 = vmatprep.subr.mxu0 0.0
  %169 = vmatpush1.msra.mxu0 0.0
  %170 = vmatprep.subr.mxu0 0.0
  %171 = vmatpush1.msra.mxu0 0.0
  %172 = vmatprep.subr.mxu0 0.0
  %173 = vmatpush1.msra.mxu0 0.0
  %174 = vmatprep.subr.mxu0 0.0
  %175 = vmatpush1.msra.mxu0 0.0
  %176 = vmatprep.subr.mxu0 0.0
  %177 = vmatpush1.msra.mxu0 0.0
  %178 = vmatprep.subr.mxu0 0.0
  %179 = vmatpush1.msra.mxu0 0.0
  %180 = vmatprep.mubr.f32.mxu0 0.0
  %181 = vmatmul.mubr.f32.gmra.mrb[0].mxu0 %v69
  %v182 = vpop.f32.mrb[0].mxu0
  %v183 = vadd.f32 0.0, %v182
  %v184 = vpop.f32.mrb[0].mxu0
  %185 = vmatprep.mubr.f32.mxu0 0.0
  %186 = vmatmul.mubr.f32.gmra.mrb[0].mxu0 %v72
  %v187 = vpop.f32.mrb[0].mxu0
  %v188 = vadd.f32 0.0, %v187
  %v189 = vpop.f32.mrb[0].mxu0
  %190 = vmatprep.mubr.f32.mxu0 0.0
  %191 = vmatmul.mubr.f32.gmra.mrb[0].mxu0 %v75
  %v192 = vpop.f32.mrb[0].mxu0
  %v193 = vadd.f32 0.0, %v192
  %v194 = vpop.f32.mrb[0].mxu0
  %195 = vmatprep.mubr.f32.mxu0 0.0
  %196 = vmatmul.mubr.f32.gmra.mrb[0].mxu0 %v78
  %v197 = vpop.f32.mrb[0].mxu0
  %v198 = vadd.f32 0.0, %v197
  %v199 = vpop.f32.mrb[0].mxu0
  %200 = vmatprep.mubr.f32.mxu0 0.0
  %201 = vmatmul.mubr.f32.gmra.mrb[0].mxu0 %v81
  %v202 = vpop.f32.mrb[0].mxu0
  %v203 = vadd.f32 0.0, %v202
  %v204 = vpop.f32.mrb[0].mxu0
  %205 = vmatprep.mubr.f32.mxu0 0.0
  %206 = vmatmul.mubr.f32.gmra.mrb[0].mxu0 %v84
  %v207 = vpop.f32.mrb[0].mxu0
  %v208 = vadd.f32 0.0, %v207
  %v209 = vpop.f32.mrb[0].mxu0
  %210 = vmatprep.mubr.f32.mxu0 0.0
  %211 = vmatmul.mubr.f32.gmra.mrb[0].mxu0 %v87
  %v212 = vpop.f32.mrb[0].mxu0
  %v213 = vadd.f32 0.0, %v212
  %v214 = vpop.f32.mrb[0].mxu0
  %215 = vmatprep.mubr.f32.mxu0 0.0
  %216 = vmatmul.mubr.f32.gmra.mrb[0].mxu0 %v90
  %v217 = vpop.f32.mrb[0].mxu0
  %v218 = vadd.f32 0.0, %v217
  %v219 = vpop.f32.mrb[0].mxu0
  %220 = vmatprep.mubr.f32.mxu0 0.0
  %221 = vmatmul.mubr.f32.gmra.mrb[0].mxu0 %v93
  %v222 = vpop.f32.mrb[0].mxu0
  %v223 = vadd.f32 0.0, %v222
  %v224 = vpop.f32.mrb[0].mxu0
  %225 = vmatprep.mubr.f32.mxu0 0.0
  %226 = vmatmul.mubr.f32.gmra.mrb[0].mxu0 %v96
  %v227 = vpop.f32.mrb[0].mxu0
  %v228 = vadd.f32 0.0, %v227
  %v229 = vpop.f32.mrb[0].mxu0
  %230 = vmatprep.mubr.f32.mxu0 0.0
  %231 = vmatmul.mubr.f32.gmra.mrb[0].mxu0 %v99
  %v232 = vpop.f32.mrb[0].mxu0
  %v233 = vadd.f32 0.0, %v232
  %v234 = vpop.f32.mrb[0].mxu0
  %235 = vmatprep.mubr.f32.mxu0 0.0
  %236 = vmatmul.mubr.f32.gmra.mrb[0].mxu0 %v102
  %v237 = vpop.f32.mrb[0].mxu0
  %v238 = vadd.f32 0.0, %v237
  %v239 = vpop.f32.mrb[0].mxu0
  %240 = vmatprep.mubr.f32.mxu0 0.0
  %241 = vmatmul.mubr.f32.gmra.mrb[0].mxu0 %v105
  %v242 = vpop.f32.mrb[0].mxu0
  %v243 = vadd.f32 0.0, %v242
  %v244 = vpop.f32.mrb[0].mxu0
  %245 = vmatprep.mubr.f32.mxu0 0.0
  %246 = vmatmul.mubr.f32.gmra.mrb[0].mxu0 %v108
  %v247 = vpop.f32.mrb[0].mxu0
  %v248 = vadd.f32 0.0, %v247
  %v249 = vpop.f32.mrb[0].mxu0
  %250 = vmatprep.mubr.f32.mxu0 0.0
  %251 = vmatmul.mubr.f32.gmra.mrb[0].mxu0 %v111
  %v252 = vpop.f32.mrb[0].mxu0
  %v253 = vadd.f32 0.0, %v252
  %v254 = vpop.f32.mrb[0].mxu0
  %255 = vmatprep.mubr.f32.mxu0 0.0
  %256 = vmatmul.mubr.f32.gmra.mrb[0].mxu0 %v114
  %v257 = vpop.f32.mrb[0].mxu0
  %v258 = vadd.f32 0.0, %v257
  %v259 = vpop.f32.mrb[0].mxu0
  %260 = vdwg.mxu0
  %v262 = vsel %vm67, %v27, 0
  %v265 = vsel %vm67, %v28, 0
  %v268 = vsel %vm67, %v29, 0
  %v271 = vsel %vm67, %v30, 0
  %v274 = vsel %vm67, %v31, 0
  %v277 = vsel %vm67, %v32, 0
  %v280 = vsel %vm67, %v33, 0
  %v283 = vsel %vm67, %v34, 0
  %v286 = vsel %vm67, %v35, 0
  %v289 = vsel %vm67, %v36, 0
  %v292 = vsel %vm67, %v37, 0
  %v295 = vsel %vm67, %v38, 0
  %v298 = vsel %vm67, %v39, 0
  %v301 = vsel %vm67, %v40, 0
  %v304 = vsel %vm67, %v41, 0
  %v307 = vsel %vm67, %v42, 0
  %309 = vmatprep.subr.mxu0 0.0
  %310 = vmatpush1.msra.mxu0 %v43
  %311 = vmatprep.subr.mxu0 0.0
  %312 = vmatpush1.msra.mxu0 %v44
  %313 = vmatprep.subr.mxu0 0.0
  %314 = vmatpush1.msra.mxu0 %v45
  %315 = vmatprep.subr.mxu0 0.0
  %316 = vmatpush1.msra.mxu0 %v46
  %317 = vmatprep.subr.mxu0 0.0
  %318 = vmatpush1.msra.mxu0 0.0
  %319 = vmatprep.subr.mxu0 0.0
  %320 = vmatpush1.msra.mxu0 0.0
  %321 = vmatprep.subr.mxu0 0.0
  %322 = vmatpush1.msra.mxu0 0.0
  %323 = vmatprep.subr.mxu0 0.0
  %324 = vmatpush1.msra.mxu0 0.0
  %325 = vmatprep.subr.mxu0 0.0
  %326 = vmatpush1.msra.mxu0 0.0
  %327 = vmatprep.subr.mxu0 0.0
  %328 = vmatpush1.msra.mxu0 0.0
  %329 = vmatprep.subr.mxu0 0.0
  %330 = vmatpush1.msra.mxu0 0.0
  %331 = vmatprep.subr.mxu0 0.0
  %332 = vmatpush1.msra.mxu0 0.0
  %333 = vmatprep.subr.mxu0 0.0
  %334 = vmatpush1.msra.mxu0 0.0
  %335 = vmatprep.subr.mxu0 0.0
  %336 = vmatpush1.msra.mxu0 0.0
  %337 = vmatprep.subr.mxu0 0.0
  %338 = vmatpush1.msra.mxu0 0.0
  %339 = vmatprep.subr.mxu0 0.0
  %340 = vmatpush1.msra.mxu0 0.0
  %341 = vmatprep.subr.mxu0 0.0
  %342 = vmatpush1.msra.mxu0 0.0
  %343 = vmatprep.subr.mxu0 0.0
  %344 = vmatpush1.msra.mxu0 0.0
  %345 = vmatprep.subr.mxu0 0.0
  %346 = vmatpush1.msra.mxu0 0.0
  %347 = vmatprep.subr.mxu0 0.0
  %348 = vmatpush1.msra.mxu0 0.0
  %349 = vmatprep.subr.mxu0 0.0
  %350 = vmatpush1.msra.mxu0 0.0
  %351 = vmatprep.subr.mxu0 0.0
  %352 = vmatpush1.msra.mxu0 0.0
  %353 = vmatprep.subr.mxu0 0.0
  %354 = vmatpush1.msra.mxu0 0.0
  %355 = vmatprep.subr.mxu0 0.0
  %356 = vmatpush1.msra.mxu0 0.0
  %357 = vmatprep.subr.mxu0 0.0
  %358 = vmatpush1.msra.mxu0 0.0
  %359 = vmatprep.subr.mxu0 0.0
  %360 = vmatpush1.msra.mxu0 0.0
  %361 = vmatprep.subr.mxu0 0.0
  %362 = vmatpush1.msra.mxu0 0.0
  %363 = vmatprep.subr.mxu0 0.0
  %364 = vmatpush1.msra.mxu0 0.0
  %365 = vmatprep.subr.mxu0 0.0
  %366 = vmatpush1.msra.mxu0 0.0
  %367 = vmatprep.subr.mxu0 0.0
  %368 = vmatpush1.msra.mxu0 0.0
  %369 = vmatprep.subr.mxu0 0.0
  %370 = vmatpush1.msra.mxu0 0.0
  %371 = vmatprep.subr.mxu0 0.0
  %372 = vmatpush1.msra.mxu0 0.0
  %373 = vmatprep.mubr.f32.mxu0 0.0
  %374 = vmatmul.mubr.f32.gmra.mrb[0].mxu0 %v262
  %v375 = vpop.f32.mrb[0].mxu0
  %v376 = vadd.f32 %v183, %v375
  %v377 = vpop.f32.mrb[0].mxu0
  %378 = vmatprep.mubr.f32.mxu0 0.0
  %379 = vmatmul.mubr.f32.gmra.mrb[0].mxu0 %v265
  %v380 = vpop.f32.mrb[0].mxu0
  %v381 = vadd.f32 %v188, %v380
  %v382 = vpop.f32.mrb[0].mxu0
  %383 = vmatprep.mubr.f32.mxu0 0.0
  %384 = vmatmul.mubr.f32.gmra.mrb[0].mxu0 %v268
  %v385 = vpop.f32.mrb[0].mxu0
  %v386 = vadd.f32 %v193, %v385
  %v387 = vpop.f32.mrb[0].mxu0
  %388 = vmatprep.mubr.f32.mxu0 0.0
  %389 = vmatmul.mubr.f32.gmra.mrb[0].mxu0 %v271
  %v390 = vpop.f32.mrb[0].mxu0
  %v391 = vadd.f32 %v198, %v390
  %v392 = vpop.f32.mrb[0].mxu0
  %393 = vmatprep.mubr.f32.mxu0 0.0
  %394 = vmatmul.mubr.f32.gmra.mrb[0].mxu0 %v274
  %v395 = vpop.f32.mrb[0].mxu0
  %v396 = vadd.f32 %v203, %v395
  %v397 = vpop.f32.mrb[0].mxu0
  %398 = vmatprep.mubr.f32.mxu0 0.0
  %399 = vmatmul.mubr.f32.gmra.mrb[0].mxu0 %v277
  %v400 = vpop.f32.mrb[0].mxu0
  %v401 = vadd.f32 %v208, %v400
  %v402 = vpop.f32.mrb[0].mxu0
  %403 = vmatprep.mubr.f32.mxu0 0.0
  %404 = vmatmul.mubr.f32.gmra.mrb[0].mxu0 %v280
  %v405 = vpop.f32.mrb[0].mxu0
  %v406 = vadd.f32 %v213, %v405
  %v407 = vpop.f32.mrb[0].mxu0
  %408 = vmatprep.mubr.f32.mxu0 0.0
  %409 = vmatmul.mubr.f32.gmra.mrb[0].mxu0 %v283
  %v410 = vpop.f32.mrb[0].mxu0
  %v411 = vadd.f32 %v218, %v410
  %v412 = vpop.f32.mrb[0].mxu0
  %413 = vmatprep.mubr.f32.mxu0 0.0
  %414 = vmatmul.mubr.f32.gmra.mrb[0].mxu0 %v286
  %v415 = vpop.f32.mrb[0].mxu0
  %v416 = vadd.f32 %v223, %v415
  %v417 = vpop.f32.mrb[0].mxu0
  %418 = vmatprep.mubr.f32.mxu0 0.0
  %419 = vmatmul.mubr.f32.gmra.mrb[0].mxu0 %v289
  %v420 = vpop.f32.mrb[0].mxu0
  %v421 = vadd.f32 %v228, %v420
  %v422 = vpop.f32.mrb[0].mxu0
  %423 = vmatprep.mubr.f32.mxu0 0.0
  %424 = vmatmul.mubr.f32.gmra.mrb[0].mxu0 %v292
  %v425 = vpop.f32.mrb[0].mxu0
  %v426 = vadd.f32 %v233, %v425
  %v427 = vpop.f32.mrb[0].mxu0
  %428 = vmatprep.mubr.f32.mxu0 0.0
  %429 = vmatmul.mubr.f32.gmra.mrb[0].mxu0 %v295
  %v430 = vpop.f32.mrb[0].mxu0
  %v431 = vadd.f32 %v238, %v430
  %v432 = vpop.f32.mrb[0].mxu0
  %433 = vmatprep.mubr.f32.mxu0 0.0
  %434 = vmatmul.mubr.f32.gmra.mrb[0].mxu0 %v298
  %v435 = vpop.f32.mrb[0].mxu0
  %v436 = vadd.f32 %v243, %v435
  %v437 = vpop.f32.mrb[0].mxu0
  %438 = vmatprep.mubr.f32.mxu0 0.0
  %439 = vmatmul.mubr.f32.gmra.mrb[0].mxu0 %v301
  %v440 = vpop.f32.mrb[0].mxu0
  %v441 = vadd.f32 %v248, %v440
  %v442 = vpop.f32.mrb[0].mxu0
  %443 = vmatprep.mubr.f32.mxu0 0.0
  %444 = vmatmul.mubr.f32.gmra.mrb[0].mxu0 %v304
  %v445 = vpop.f32.mrb[0].mxu0
  %v446 = vadd.f32 %v253, %v445
  %v447 = vpop.f32.mrb[0].mxu0
  %448 = vmatprep.mubr.f32.mxu0 0.0
  %449 = vmatmul.mubr.f32.gmra.mrb[0].mxu0 %v307
  %v450 = vpop.f32.mrb[0].mxu0
  %v451 = vadd.f32 %v258, %v450
  %v452 = vpop.f32.mrb[0].mxu0
  %453 = vdwg.mxu0
  %v454 = vld [vmem:[%s4] sm:$0x1]
  %v456 = vlaneseq
  %v457 = vshrl.u32 %v456, 7
  %v458 = vsub.s32 0, %v457
  %v459 = vrot.slane %v454, %v458
  %v461 = vadd.f32 %v376, %v459
  %v462 = vadd.f32 %v381, %v459
  %v463 = vadd.f32 %v386, %v459
  %v464 = vadd.f32 %v391, %v459
  %v465 = vadd.f32 %v396, %v459
  %v466 = vadd.f32 %v401, %v459
  %v467 = vadd.f32 %v406, %v459
  %v468 = vadd.f32 %v411, %v459
  %v469 = vadd.f32 %v416, %v459
  %v470 = vadd.f32 %v421, %v459
  %v471 = vadd.f32 %v426, %v459
  %v472 = vadd.f32 %v431, %v459
  %v473 = vadd.f32 %v436, %v459
  %v474 = vadd.f32 %v441, %v459
  %v475 = vadd.f32 %v446, %v459
  %v476 = vadd.f32 %v451, %v459
  %v477 = vmax.f32 %v461, 0.0
  %v478 = vmax.f32 %v462, 0.0
  %v479 = vmax.f32 %v463, 0.0
  %v480 = vmax.f32 %v464, 0.0
  %v481 = vmax.f32 %v465, 0.0
  %v482 = vmax.f32 %v466, 0.0
  %v483 = vmax.f32 %v467, 0.0
  %v484 = vmax.f32 %v468, 0.0
  %v485 = vmax.f32 %v469, 0.0
  %v486 = vmax.f32 %v470, 0.0
  %v487 = vmax.f32 %v471, 0.0
  %v488 = vmax.f32 %v472, 0.0
  %v489 = vmax.f32 %v473, 0.0
  %v490 = vmax.f32 %v474, 0.0
  %v491 = vmax.f32 %v475, 0.0
  %v492 = vmax.f32 %v476, 0.0
  %v493 = vld [vmem:[%s5] sm:$0x1]
  %s494 = sld [smem:[#allocation2]]
  %v495 = vstv %s494
  %496 = vmatprep.subr.mxu0 0.0
  %497 = vmatpush1.xpose.msra.mxu0 %v477
  %498 = vmatprep.subr.mxu0 0.0
  %499 = vmatpush1.xpose.msra.mxu0 %v478
  %500 = vmatprep.subr.mxu0 0.0
  %501 = vmatpush1.xpose.msra.mxu0 %v479
  %502 = vmatprep.subr.mxu0 0.0
  %503 = vmatpush1.xpose.msra.mxu0 %v480
  %504 = vmatprep.subr.mxu0 0.0
  %505 = vmatpush1.xpose.msra.mxu0 %v481
  %506 = vmatprep.subr.mxu0 0.0
  %507 = vmatpush1.xpose.msra.mxu0 %v482
  %508 = vmatprep.subr.mxu0 0.0
  %509 = vmatpush1.xpose.msra.mxu0 %v483
  %510 = vmatprep.subr.mxu0 0.0
  %511 = vmatpush1.xpose.msra.mxu0 %v484
  %512 = vmatprep.subr.mxu0 0.0
  %513 = vmatpush1.xpose.msra.mxu0 %v485
  %514 = vmatprep.subr.mxu0 0.0
  %515 = vmatpush1.xpose.msra.mxu0 %v486
  %516 = vmatprep.subr.mxu0 0.0
  %517 = vmatpush1.xpose.msra.mxu0 %v487
  %518 = vmatprep.subr.mxu0 0.0
  %519 = vmatpush1.xpose.msra.mxu0 %v488
  %520 = vmatprep.subr.mxu0 0.0
  %521 = vmatpush1.xpose.msra.mxu0 %v489
  %522 = vmatprep.subr.mxu0 0.0
  %523 = vmatpush1.xpose.msra.mxu0 %v490
  %524 = vmatprep.subr.mxu0 0.0
  %525 = vmatpush1.xpose.msra.mxu0 %v491
  %526 = vmatprep.subr.mxu0 0.0
  %527 = vmatpush1.xpose.msra.mxu0 %v492
  %528 = vmatprep.subr.mxu0 0.0
  %529 = vmatpush1.xpose.msra.mxu0 0.0
  %530 = vmatprep.subr.mxu0 0.0
  %531 = vmatpush1.xpose.msra.mxu0 0.0
  %532 = vmatprep.subr.mxu0 0.0
  %533 = vmatpush1.xpose.msra.mxu0 0.0
  %534 = vmatprep.subr.mxu0 0.0
  %535 = vmatpush1.xpose.msra.mxu0 0.0
  %536 = vmatprep.subr.mxu0 0.0
  %537 = vmatpush1.xpose.msra.mxu0 0.0
  %538 = vmatprep.subr.mxu0 0.0
  %539 = vmatpush1.xpose.msra.mxu0 0.0
  %540 = vmatprep.subr.mxu0 0.0
  %541 = vmatpush1.xpose.msra.mxu0 0.0
  %542 = vmatprep.subr.mxu0 0.0
  %543 = vmatpush1.xpose.msra.mxu0 0.0
  %544 = vmatprep.subr.mxu0 0.0
  %545 = vmatpush1.xpose.msra.mxu0 0.0
  %546 = vmatprep.subr.mxu0 0.0
  %547 = vmatpush1.xpose.msra.mxu0 0.0
  %548 = vmatprep.subr.mxu0 0.0
  %549 = vmatpush1.xpose.msra.mxu0 0.0
  %550 = vmatprep.subr.mxu0 0.0
  %551 = vmatpush1.xpose.msra.mxu0 0.0
  %552 = vmatprep.subr.mxu0 0.0
  %553 = vmatpush1.xpose.msra.mxu0 0.0
  %554 = vmatprep.subr.mxu0 0.0
  %555 = vmatpush1.xpose.msra.mxu0 0.0
  %556 = vmatprep.subr.mxu0 0.0
  %557 = vmatpush1.xpose.msra.mxu0 0.0
  %558 = vmatprep.subr.mxu0 0.0
  %559 = vmatpush1.xpose.msra.mxu0 0.0
  %560 = vmatprep.mubr.f32.mxu0 0.0
  %561 = vmatmul.mubr.f32.gmra.mrb[0].mxu0 %v493
  %v562 = vpop.f32.mrb[0].mxu0
  %v563 = vadd.f32 %v495, %v562
  %v564 = vpop.f32.mrb[0].mxu0
  %565 = vdwg.mxu0
  %566 = vst [vmem:[%s7] sm:$0x1] %v563
  // Predicated region
  $region30: #{mlpnn_forward.1} parent=0 // pred_check
    _
  $region31: #{mlpnn_forward.1} parent=0 // pred_check_branch
    %568 = sbr.rel (0) target = $region33
  $region32: #{mlpnn_forward.1} parent=0 // pred_region
    _
  $region33: #{mlpnn_forward.1} parent=0 // pred_fallthru
    _
  // Predicated region
  $region34: #{mlpnn_forward.1} parent=0 // pred_check
    _
  $region35: #{mlpnn_forward.1} parent=0 // pred_check_branch
    %570 = sbr.rel (0) target = $region37
  $region36: #{mlpnn_forward.1} parent=0 // pred_region
    _
  $region37: #{mlpnn_forward.1} parent=0 // pred_fallthru
    _

</llo_original>
